<compile_context>
chip_gen: v7x
topology: tpu7x:2x2x1
jax: 0.10.0
libtpu: 0.0.40
codegen_flags: <defaults>
</compile_context>

<pallas_src>
import functools

import jax
import jax.numpy as jnp
from jax.experimental import pallas as pl
from jax.experimental.pallas import tpu as pltpu


def center_loss_kernel(labels_ref, x_ref, centers_hbm, out_ref,
                       cbuf, sems, row_acc, *, tb, batch):
    """Grid point (g, t) processes row block g*T + t of x.

    labels_ref  : SMEM (B,)        int32  -- scalar-prefetched labels
    x_ref       : VMEM (tb, D)     f32    -- auto-pipelined x tile
    centers_hbm : HBM  (C, D)      f32    -- raw ref, gathered per row
    out_ref     : VMEM (8, 128)    f32    -- per-g partial sum (lane-dense)
    cbuf        : VMEM (2, tb, D)  f32    -- double-buffered gathered centers
    sems        : DMA semaphores (2,)     -- one per buffer slot
    row_acc     : VMEM (tb, 1)     f32    -- persistent per-row accumulator
    """
    g = pl.program_id(0)            # "parallel" axis (core split on v7x)
    t = pl.program_id(1)            # "arbitrary" axis (reduction over tiles)
    n_inner = pl.num_programs(1)
    slot = t % 2

    def issue_gather(block_idx, buf_slot):
        base = block_idx * tb

        @pl.loop(0, tb)
        def _(r):
            # Clamp so ragged/padded rows still issue in-bounds DMAs; those
            # rows are removed from the reduction below.
            row = jnp.minimum(base + r, batch - 1)
            lbl = labels_ref[row]
            pltpu.make_async_copy(
                centers_hbm.at[lbl], cbuf.at[buf_slot, r], sems.at[buf_slot]
            ).start()

    @pl.when(t == 0)
    def _():
        row_acc[...] = jnp.zeros_like(row_acc)
        issue_gather(g * n_inner, 0)                 # prime slot 0

    @pl.when(t + 1 < n_inner)
    def _():
        issue_gather(g * n_inner + t + 1, 1 - slot)  # prefetch next tile

    # Single aggregated wait: the tb row copies of D*4 bytes each signal
    # sems[slot]; this descriptor covers exactly tb*D elements.
    pltpu.make_async_copy(cbuf.at[slot], cbuf.at[slot], sems.at[slot]).wait()

    x = x_ref[...]                                   # (tb, D)
    c = cbuf[slot]                                   # (tb, D) gathered rows
    diff = x - c
    d = jnp.sum(diff * diff, axis=1, keepdims=True)  # (tb, 1) ||x_i - c_{l_i}||^2
    d = jnp.clip(d, 1e-12, 1e12)                     # per-row clamp (as reference)

    # NaN-safe removal of padded rows on the ragged last tile.
    base = (g * n_inner + t) * tb
    rows = base + jax.lax.broadcasted_iota(jnp.int32, (tb, 1), 0)
    row_acc[...] += jnp.where(rows < batch, d, 0.0)

    @pl.when(t == n_inner - 1)
    def _():
        total = jnp.sum(row_acc[...])                # one XLU collapse per g
        out_ref[...] = jnp.broadcast_to(total, (8, 128))


def center_loss(x, centers, labels, *, tb=256):
    """x: (B, D) float, centers: (C, D) float, labels: (B,) int."""
    B, D = x.shape
    C, Dc = centers.shape
    assert D == Dc, "feature dims of x and centers must match"

    x = x.astype(jnp.float32)
    centers = centers.astype(jnp.float32)
    labels = labels.astype(jnp.int32)

    # Tile must be a multiple of 8 (sublane) or equal to the full batch.
    if tb >= B:
        tb = B
    else:
        tb = max(8, (tb // 8) * 8)

    num_blocks = pl.cdiv(B, tb)
    # 2-way outer split (used by both TensorCores on v7x) when it divides
    # evenly; otherwise a single reduction chain.
    G = 2 if (num_blocks % 2 == 0 and num_blocks >= 2) else 1
    T = num_blocks // G

    kernel = functools.partial(center_loss_kernel, tb=tb, batch=B)

    partial = pl.pallas_call(
        kernel,
        out_shape=jax.ShapeDtypeStruct((G * 8, 128), jnp.float32),
        grid_spec=pltpu.PrefetchScalarGridSpec(
            num_scalar_prefetch=1,                            # labels -> SMEM
            grid=(G, T),
            in_specs=[
                pl.BlockSpec((tb, D), lambda g, t, lab: (g * T + t, 0)),  # x
                pl.BlockSpec(memory_space=pl.ANY),            # centers in HBM
            ],
            out_specs=pl.BlockSpec((8, 128), lambda g, t, lab: (g, 0)),
            scratch_shapes=[
                pltpu.VMEM((2, tb, D), jnp.float32),          # gathered centers
                pltpu.SemaphoreType.DMA((2,)),                # one sem per slot
                pltpu.VMEM((tb, 1), jnp.float32),             # row accumulator
            ],
        ),
        compiler_params=pltpu.CompilerParams(
            dimension_semantics=("parallel", "arbitrary"),
            vmem_limit_bytes=32 * 1024 * 1024,
        ),
    )(labels, x, centers)

    per_core = partial.reshape(G, 8, 128)[:, 0, 0]            # one value per g
    # clamp-after-mask quirk: each of the B*(C-1) masked-out entries clamps to
    # 1e-12; divided by B that is exactly (C-1)*1e-12.
    quirk = jnp.float32((C - 1) * 1e-12)
    return jnp.sum(per_core) / jnp.float32(B) + quirk


def center_loss_ref(x, centers, labels):
    """Plain-JAX reference mirroring the PyTorch forward exactly."""
    B = x.shape[0]
    C = centers.shape[0]
    xx = jnp.sum(x * x, axis=1, keepdims=True)
    cc = jnp.sum(centers * centers, axis=1, keepdims=True).T
    xc = jnp.dot(x, centers.T, precision=jax.lax.Precision.HIGHEST)
    distmat = xx + cc - 2.0 * xc
    mask = (labels[:, None] == jnp.arange(C)[None, :]).astype(jnp.float32)
    dist = jnp.clip(distmat * mask, 1e-12, 1e12)
    return jnp.sum(dist) / B


if __name__ == "__main__":
    # Small synthetic configuration (module defaults are 751 classes / 2048 dim).
    key = jax.random.PRNGKey(0)
    kx, kc, kl, kx2, kl2 = jax.random.split(key, 5)

    B1, D1, C1 = 64, 256, 48
    x1 = jax.random.normal(kx, (B1, D1), dtype=jnp.float32)
    # Deterministic parameter init (torch.randn equivalent) passed as input.
    centers = jax.random.normal(kc, (C1, D1), dtype=jnp.float32)
    labels1 = jax.random.randint(kl, (B1,), 0, C1, dtype=jnp.int32)

    # Case 1: aligned batch, multi-tile grid, double-buffered gathers.
    out1 = jax.block_until_ready(center_loss(x1, centers, labels1, tb=16))
    ref1 = jax.block_until_ready(center_loss_ref(x1, centers, labels1))
    assert jnp.allclose(out1, ref1, rtol=1e-5, atol=1e-3), (out1, ref1)

    # Case 2: ragged last tile (B not a multiple of tb).
    B2 = 60
    x2 = jax.random.normal(kx2, (B2, D1), dtype=jnp.float32)
    labels2 = jax.random.randint(kl2, (B2,), 0, C1, dtype=jnp.int32)
    out2 = jax.block_until_ready(center_loss(x2, centers, labels2, tb=16))
    ref2 = jax.block_until_ready(center_loss_ref(x2, centers, labels2))
    assert jnp.allclose(out2, ref2, rtol=1e-5, atol=1e-3), (out2, ref2)

    # Case 3: default (large) tile -> whole batch in one grid step.
    out3 = jax.block_until_ready(center_loss(x1, centers, labels1))
    assert jnp.allclose(out3, ref1, rtol=1e-5, atol=1e-3), (out3, ref1)

    print("KERNEL_OK")
</pallas_src>

<mosaic_0001>
module attributes {stable_mosaic.version = 11 : i64} {
  func.func @center_loss_kernel(%arg0: i32, %arg1: i32, %arg2: memref<64xi32, #tpu.memory_space<smem>>, %arg3: memref<16x256xf32, #tpu.memory_space<vmem>>, %arg4: memref<48x256xf32, #tpu.memory_space<any>>, %arg5: memref<8x128xf32, #tpu.memory_space<vmem>>, %arg6: memref<2x16x256xf32, #tpu.memory_space<vmem>>, %arg7: memref<2x!tpu.dma_semaphore, #tpu.memory_space<semaphore_mem>>, %arg8: memref<16x1xf32, #tpu.memory_space<vmem>>) attributes {dimension_semantics = [#tpu.dimension_semantics<parallel>, #tpu.dimension_semantics<arbitrary>], iteration_bounds = array<i64: 2, 2>, scalar_prefetch = 1 : i64, scratch_operands = 3 : i64, tpu.core_type = #tpu.core_type<tc>, window_params = [{transform_indices = @transform_0, window_bounds = array<i64: 16, 256>}, {}, {transform_indices = @transform_2, window_bounds = array<i64: 8, 128>}]} {
    %c2_i32 = arith.constant 2 : i32
    %c0_i32 = arith.constant 0 : i32
    %0 = arith.cmpi eq, %c2_i32, %c0_i32 : i32
    %c1_i32 = arith.constant 1 : i32
    %1 = arith.select %0, %c1_i32, %c2_i32 : i32
    %2 = arith.remsi %arg1, %1 : i32
    %c0_i32_0 = arith.constant 0 : i32
    %3 = arith.cmpi ne, %2, %c0_i32_0 : i32
    %c0_i32_1 = arith.constant 0 : i32
    %4 = arith.cmpi slt, %2, %c0_i32_1 : i32
    %c0_i32_2 = arith.constant 0 : i32
    %5 = arith.cmpi slt, %1, %c0_i32_2 : i32
    %6 = arith.xori %4, %5 : i1
    %7 = arith.andi %6, %3 : i1
    %8 = arith.addi %2, %1 : i32
    %9 = arith.select %7, %8, %2 : i32
    %c0_i32_3 = arith.constant 0 : i32
    %10 = arith.cmpi eq, %arg1, %c0_i32_3 : i32
    %11 = arith.extui %10 : i1 to i32
    %c0_i32_4 = arith.constant 0 : i32
    %12 = arith.cmpi ne, %11, %c0_i32_4 : i32
    scf.if %12 {
      %cst_25 = arith.constant 0.000000e+00 : f32
      %51 = vector.broadcast %cst_25 : f32 to vector<16x1xf32>
      %c0_26 = arith.constant 0 : index
      %c0_27 = arith.constant 0 : index
      %52 = vector.load %arg8[%c0_26, %c0_27] : memref<16x1xf32, #tpu.memory_space<vmem>>, vector<16x1xf32>
      tpu.vector_store %arg8[%c0_26, %c0_27], %51 {strides = array<i32>} : memref<16x1xf32, #tpu.memory_space<vmem>>, vector<16x1xf32>,
      %c2_i32_28 = arith.constant 2 : i32
      %53 = arith.muli %arg0, %c2_i32_28 : i32
      %c16_i32_29 = arith.constant 16 : i32
      %54 = arith.muli %53, %c16_i32_29 : i32
      %c0_i32_30 = arith.constant 0 : i32
      %c16_i32_31 = arith.constant 16 : i32
      %55 = arith.addi %c0_i32_30, %c16_i32_31 : i32
      %c1_i32_32 = arith.constant 1 : i32
      scf.for %arg9 = %c0_i32_30 to %55 step %c1_i32_32  : i32 {
        %c1_i32_34 = arith.constant 1 : i32
        %56 = arith.muli %arg9, %c1_i32_34 : i32
        %c0_i32_35 = arith.constant 0 : i32
        %57 = arith.addi %c0_i32_35, %56 : i32
        %58 = arith.addi %54, %57 : i32
        %c63_i32 = arith.constant 63 : i32
        %59 = arith.minsi %58, %c63_i32 : i32
        %60 = arith.index_cast %59 : i32 to index
        %61 = memref.load %arg2[%60] : memref<64xi32, #tpu.memory_space<smem>>
        %c0_i32_36 = arith.constant 0 : i32
        %c0_i32_37 = arith.constant 0 : i32
        %c0_i32_38 = arith.constant 0 : i32
        %62 = tpu.memref_slice %arg4[%61, %c0_i32_38] : memref<48x256xf32, #tpu.memory_space<any>> -> memref<1x256xf32, #tpu.memory_space<any>>
        %63 = tpu.memref_squeeze %62 : memref<1x256xf32, #tpu.memory_space<any>> -> memref<256xf32, #tpu.memory_space<any>>
        %c0_i32_39 = arith.constant 0 : i32
        %64 = tpu.memref_slice %arg6[%c0_i32_36, %57, %c0_i32_39] : memref<2x16x256xf32, #tpu.memory_space<vmem>> -> memref<1x1x256xf32, #tpu.memory_space<vmem>>
        %65 = tpu.memref_squeeze %64 : memref<1x1x256xf32, #tpu.memory_space<vmem>> -> memref<256xf32, #tpu.memory_space<vmem>>
        %66 = tpu.memref_slice %arg7[%c0_i32_37] : memref<2x!tpu.dma_semaphore, #tpu.memory_space<semaphore_mem>> -> memref<1x!tpu.dma_semaphore, #tpu.memory_space<semaphore_mem>>
        %67 = tpu.memref_squeeze %66 : memref<1x!tpu.dma_semaphore, #tpu.memory_space<semaphore_mem>> -> memref<!tpu.dma_semaphore, #tpu.memory_space<semaphore_mem>>
        tpu.enqueue_dma source(%63 : memref<256xf32, #tpu.memory_space<any>>) target(%65 : memref<256xf32, #tpu.memory_space<vmem>>) target_semaphore(%67 : memref<!tpu.dma_semaphore, #tpu.memory_space<semaphore_mem>>)
      }
      %c16_i32_33 = arith.constant 16 : i32
    } else {
    }
    %c1_i32_5 = arith.constant 1 : i32
    %13 = arith.addi %arg1, %c1_i32_5 : i32
    %c2_i32_6 = arith.constant 2 : i32
    %14 = arith.cmpi slt, %13, %c2_i32_6 : i32
    %15 = arith.extui %14 : i1 to i32
    %c0_i32_7 = arith.constant 0 : i32
    %16 = arith.cmpi ne, %15, %c0_i32_7 : i32
    scf.if %16 {
      %c2_i32_25 = arith.constant 2 : i32
      %51 = arith.muli %arg0, %c2_i32_25 : i32
      %52 = arith.addi %51, %arg1 : i32
      %c1_i32_26 = arith.constant 1 : i32
      %53 = arith.addi %52, %c1_i32_26 : i32
      %c1_i32_27 = arith.constant 1 : i32
      %54 = arith.subi %c1_i32_27, %9 : i32
      %c16_i32_28 = arith.constant 16 : i32
      %55 = arith.muli %53, %c16_i32_28 : i32
      %c0_i32_29 = arith.constant 0 : i32
      %c16_i32_30 = arith.constant 16 : i32
      %56 = arith.addi %c0_i32_29, %c16_i32_30 : i32
      %c1_i32_31 = arith.constant 1 : i32
      scf.for %arg9 = %c0_i32_29 to %56 step %c1_i32_31  : i32 {
        %c1_i32_33 = arith.constant 1 : i32
        %57 = arith.muli %arg9, %c1_i32_33 : i32
        %c0_i32_34 = arith.constant 0 : i32
        %58 = arith.addi %c0_i32_34, %57 : i32
        %59 = arith.addi %55, %58 : i32
        %c63_i32 = arith.constant 63 : i32
        %60 = arith.minsi %59, %c63_i32 : i32
        %61 = arith.index_cast %60 : i32 to index
        %62 = memref.load %arg2[%61] : memref<64xi32, #tpu.memory_space<smem>>
        %c0_i32_35 = arith.constant 0 : i32
        %63 = tpu.memref_slice %arg4[%62, %c0_i32_35] : memref<48x256xf32, #tpu.memory_space<any>> -> memref<1x256xf32, #tpu.memory_space<any>>
        %64 = tpu.memref_squeeze %63 : memref<1x256xf32, #tpu.memory_space<any>> -> memref<256xf32, #tpu.memory_space<any>>
        %c0_i32_36 = arith.constant 0 : i32
        %65 = tpu.memref_slice %arg6[%54, %58, %c0_i32_36] : memref<2x16x256xf32, #tpu.memory_space<vmem>> -> memref<1x1x256xf32, #tpu.memory_space<vmem>>
        %66 = tpu.memref_squeeze %65 : memref<1x1x256xf32, #tpu.memory_space<vmem>> -> memref<256xf32, #tpu.memory_space<vmem>>
        %67 = tpu.memref_slice %arg7[%54] : memref<2x!tpu.dma_semaphore, #tpu.memory_space<semaphore_mem>> -> memref<1x!tpu.dma_semaphore, #tpu.memory_space<semaphore_mem>>
        %68 = tpu.memref_squeeze %67 : memref<1x!tpu.dma_semaphore, #tpu.memory_space<semaphore_mem>> -> memref<!tpu.dma_semaphore, #tpu.memory_space<semaphore_mem>>
        tpu.enqueue_dma source(%64 : memref<256xf32, #tpu.memory_space<any>>) target(%66 : memref<256xf32, #tpu.memory_space<vmem>>) target_semaphore(%68 : memref<!tpu.dma_semaphore, #tpu.memory_space<semaphore_mem>>)
      }
      %c16_i32_32 = arith.constant 16 : i32
    } else {
    }
    %c0_i32_8 = arith.constant 0 : i32
    %c0_i32_9 = arith.constant 0 : i32
    %17 = tpu.memref_slice %arg6[%9, %c0_i32_8, %c0_i32_9] : memref<2x16x256xf32, #tpu.memory_space<vmem>> -> memref<1x16x256xf32, #tpu.memory_space<vmem>>
    %18 = tpu.memref_squeeze %17 : memref<1x16x256xf32, #tpu.memory_space<vmem>> -> memref<16x256xf32, #tpu.memory_space<vmem>>
    %c0_i32_10 = arith.constant 0 : i32
    %c0_i32_11 = arith.constant 0 : i32
    %19 = tpu.memref_slice %arg6[%9, %c0_i32_10, %c0_i32_11] : memref<2x16x256xf32, #tpu.memory_space<vmem>> -> memref<1x16x256xf32, #tpu.memory_space<vmem>>
    %20 = tpu.memref_squeeze %19 : memref<1x16x256xf32, #tpu.memory_space<vmem>> -> memref<16x256xf32, #tpu.memory_space<vmem>>
    %21 = tpu.memref_slice %arg7[%9] : memref<2x!tpu.dma_semaphore, #tpu.memory_space<semaphore_mem>> -> memref<1x!tpu.dma_semaphore, #tpu.memory_space<semaphore_mem>>
    %22 = tpu.memref_squeeze %21 : memref<1x!tpu.dma_semaphore, #tpu.memory_space<semaphore_mem>> -> memref<!tpu.dma_semaphore, #tpu.memory_space<semaphore_mem>>
    tpu.wait_dma2 semaphore(%22 : memref<!tpu.dma_semaphore, #tpu.memory_space<semaphore_mem>>) src(%18 : memref<16x256xf32, #tpu.memory_space<vmem>>) dst(%20 : memref<16x256xf32, #tpu.memory_space<vmem>>)
    %c0 = arith.constant 0 : index
    %c0_12 = arith.constant 0 : index
    %23 = vector.load %arg3[%c0, %c0_12] : memref<16x256xf32, #tpu.memory_space<vmem>>, vector<16x256xf32>
    %24 = arith.index_cast %9 : i32 to index
    %c0_13 = arith.constant 0 : index
    %c0_14 = arith.constant 0 : index
    %25 = vector.load %arg6[%24, %c0_13, %c0_14] : memref<2x16x256xf32, #tpu.memory_space<vmem>>, vector<1x16x256xf32>
    %26 = vector.shape_cast %25 : vector<1x16x256xf32> to vector<16x256xf32>
    %27 = arith.subf %23, %26 : vector<16x256xf32>
    %28 = arith.mulf %27, %27 : vector<16x256xf32>
    %cst = arith.constant dense<0.000000e+00> : vector<16xf32>
    %29 = vector.multi_reduction <add>, %28, %cst [1] : vector<16x256xf32> to vector<16xf32>
    %30 = vector.shape_cast %29 : vector<16xf32> to vector<16x1xf32>
    %cst_15 = arith.constant 9.99999996E-13 : f32
    %cst_16 = arith.constant 9.99999995E+11 : f32
    %31 = vector.broadcast %cst_15 : f32 to vector<16x1xf32>
    %32 = arith.maximumf %31, %30 : vector<16x1xf32>
    %33 = vector.broadcast %cst_16 : f32 to vector<16x1xf32>
    %34 = arith.minimumf %33, %32 : vector<16x1xf32>
    %c2_i32_17 = arith.constant 2 : i32
    %35 = arith.muli %arg0, %c2_i32_17 : i32
    %36 = arith.addi %35, %arg1 : i32
    %c16_i32 = arith.constant 16 : i32
    %37 = arith.muli %36, %c16_i32 : i32
    %38 = tpu.iota {dimensions = array<i32: 0>} : vector<16x1xi32>
    %39 = vector.broadcast %37 : i32 to vector<16x1xi32>
    %40 = arith.addi %39, %38 : vector<16x1xi32>
    %c0_18 = arith.constant 0 : index
    %c0_19 = arith.constant 0 : index
    %41 = vector.load %arg8[%c0_18, %c0_19] : memref<16x1xf32, #tpu.memory_space<vmem>>, vector<16x1xf32>
    %c64_i32 = arith.constant 64 : i32
    %42 = vector.broadcast %c64_i32 : i32 to vector<16x1xi32>
    %43 = arith.cmpi slt, %40, %42 : vector<16x1xi32>
    %cst_20 = arith.constant 0.000000e+00 : f32
    %44 = vector.broadcast %cst_20 : f32 to vector<16x1xf32>
    %45 = arith.select %43, %34, %44 : vector<16x1xi1>, vector<16x1xf32>
    %46 = arith.addf %41, %45 : vector<16x1xf32>
    %c0_21 = arith.constant 0 : index
    %c0_22 = arith.constant 0 : index
    %47 = vector.load %arg8[%c0_21, %c0_22] : memref<16x1xf32, #tpu.memory_space<vmem>>, vector<16x1xf32>
    tpu.vector_store %arg8[%c0_21, %c0_22], %46 {strides = array<i32>} : memref<16x1xf32, #tpu.memory_space<vmem>>, vector<16x1xf32>,
    %c1_i32_23 = arith.constant 1 : i32
    %48 = arith.cmpi eq, %arg1, %c1_i32_23 : i32
    %49 = arith.extui %48 : i1 to i32
    %c0_i32_24 = arith.constant 0 : i32
    %50 = arith.cmpi ne, %49, %c0_i32_24 : i32
    scf.if %50 {
      %c0_25 = arith.constant 0 : index
      %c0_26 = arith.constant 0 : index
      %51 = vector.load %arg8[%c0_25, %c0_26] : memref<16x1xf32, #tpu.memory_space<vmem>>, vector<16x1xf32>
      %52 = vector.shape_cast %51 : vector<16x1xf32> to vector<1x16x1xf32>
      %cst_27 = arith.constant dense<0.000000e+00> : vector<1xf32>
      %53 = vector.multi_reduction <add>, %52, %cst_27 [1, 2] : vector<1x16x1xf32> to vector<1xf32>
      %54 = vector.shape_cast %53 : vector<1xf32> to vector<1x1x1xf32>
      %55 = vector.extract %54[0, 0, 0] : f32 from vector<1x1x1xf32>
      %56 = vector.broadcast %55 : f32 to vector<8x128xf32>
      %c0_28 = arith.constant 0 : index
      %c0_29 = arith.constant 0 : index
      %57 = vector.load %arg5[%c0_28, %c0_29] : memref<8x128xf32, #tpu.memory_space<vmem>>, vector<8x128xf32>
      tpu.vector_store %arg5[%c0_28, %c0_29], %56 {strides = array<i32>} : memref<8x128xf32, #tpu.memory_space<vmem>>, vector<8x128xf32>,
    } else {
    }
    return
  }
  func.func @transform_0(%arg0: i32, %arg1: i32, %arg2: memref<64xi32, #tpu.memory_space<smem>>) -> (i32, i32) {
    %c2_i32 = arith.constant 2 : i32
    %0 = arith.muli %arg0, %c2_i32 : i32
    %1 = arith.addi %0, %arg1 : i32
    %c0_i32 = arith.constant 0 : i32
    %c0_i32_0 = arith.constant 0 : i32
    return %1, %c0_i32 : i32, i32
  }
  func.func @transform_2(%arg0: i32, %arg1: i32, %arg2: memref<64xi32, #tpu.memory_space<smem>>) -> (i32, i32) {
    %c0_i32 = arith.constant 0 : i32
    %c0_i32_0 = arith.constant 0 : i32
    return %arg0, %c0_i32 : i32, i32
  }
}

</mosaic_0001>

<llo_original>
// kernel: tpu_custom_call.1
$region0: #{tpu_custom_call.1}
  #allocation0 [shape = 'u32[]', space=smem, size = 0x4, offset = 0x4, fixed_abs, tag = 'smem constant byte address 0x4 - core index']
  #allocation1 [shape = 'u32[144,128]{1,0:T(1,128)}', space=vmem, size = 0x12000, scoped, tag = 'internal scratch']
  #allocation2 [shape = 'f32[2,16,256]{2,1,0:T(8,128)}', space=vmem, size = 0x8000, scoped, tag = 'scratch operand']
  #allocation3 [shape = 's32[2]{0}', space=sflag, size = 0x8, scoped, tag = 'scratch operand']
  #allocation4 [shape = 'f32[16,1]{1,0:T(8,128)}', space=vmem, size = 0x2000, scoped, tag = 'scratch operand']
  #allocation5 [shape = 's32[1]{0}', space=sflag, size = 0x4, scoped, tag = 'scoped memory for tpu_custom_call.1']
  #allocation6 [shape = 'u8[512]{0}', space=smem, size = 0x200, scoped, tag = 'prefetched SMEM operand 0']
  #allocation11 [shape = 's32[]', space=sflag, size = 0x4, offset = 0, fixed_abs, tag = 'sflag constant byte address 0x0 - dummy sync flag']
  #allocation12 [shape = 's32[]', space=sflag, size = 0x4, offset = 0, fixed_abs, tag = 'sflag constant byte address 0x0 - dummy sync flag']
  %s0 = inlined_call_operand.hbm [shape: s32[64], index: 0, kind: input, shape index: {}]
  %s1 = inlined_call_operand.hbm [shape: f32[64,256], index: 1, kind: input, shape index: {}]
  %s2 = inlined_call_operand.hbm [shape: f32[48,256], index: 2, kind: input, shape index: {}]
  %s3 = inlined_call_operand.hbm [shape: f32[16,128], index: 3, kind: output, shape index: {}]
  %s4 = sld [smem:[#allocation0]]
  $region67: #{tpu_custom_call.1} parent=0
    _
  %s6 = ssub.s32 1, %s4
  %s7 = scalar_select 0, %s6, %s4
  %9 = dma.hbm_to_smem %s0, 16, [#allocation6], [#allocation5]
  %10 = dma.done [#allocation5], 16
  %11 = sfence
  $region1: #{tpu_custom_call.1} parent=0
    #allocation7 [shape = 'u8[32768]{0}', space=vmem, size = 0x8000, scoped, tag = 'input window, operand 1']
    #allocation8 [shape = 's32[2]{0}', space=sflag, size = 0x8, scoped, tag = 'scoped memory for tpu_custom_call.1']
    #allocation9 [shape = 's32[2]{0}', space=sflag, size = 0x8, scoped, tag = 'scoped memory for tpu_custom_call.1']
    #allocation10 [shape = 'u8[8192]{0}', space=vmem, size = 0x2000, scoped, tag = 'output window, operand 0']
    %12 = vsyncpa [#allocation8], 0
    %s13 = scalar_lea.sflag [#allocation8], 1
    %14 = vsyncpa %s13, 0
    %15 = vsyncpa [#allocation9], 0
    %s16 = scalar_lea.sflag [#allocation9], 1
    %17 = vsyncpa %s16, 0
    loop: start=0, step=1, limit=6
    $region2: #{tpu_custom_call.1} parent=1 // loop_pre_header
      _
    $region3: #{tpu_custom_call.1} parent=1 // loop_header
      %s19 = sphi 0, %s23
      %p20 = scmp.ge.s32.totalorder %s19, 6
      %s26 = sphi 0, %s38
      %s27 = sphi 0, %s34
      %s28 = sphi 0, %s26
      %s29 = sphi 0, %s27
      %s30 = sphi 0, %s28
      %s31 = sphi 0, %s29
      %s45 = sphi 0, %s47
      %s48 = sphi 0, %s45
      %s49 = sphi 0, %s48
      %s65 = sphi 0, %s49
      %s71 = sphi 0, %s73
      %s74 = sphi 0, %s71
      %s75 = sphi 0, %s74
      %s91 = sphi 0, %s75
    $region4: #{tpu_custom_call.1} parent=1 // loop_header_branch
      %22 = sbr.rel (%p20) target = $region8
    $region5: #{tpu_custom_call.1} parent=1 // loop_body
      %s24 = ssub.s32 %s19, 1
      %s25 = ssub.s32 %s19, 2
      %s32 = sadd.s32 1, %s27
      %p33 = scmp.ge.s32.totalorder %s32, 2
      %s34 = scalar_select %p33, 0, %s32
      %s35 = sadd.s32 1, %s26
      %s36 = scalar_select %p33, %s35, %s26
      %p37 = scmp.ge.s32.totalorder %s36, 2
      %s38 = scalar_select %p37, 0, %s36
      %s39 = smul.u32 %s26, 2
      %s40 = sadd.s32 %s39, %s27
      %s41 = smul.u32 %s38, 2
      %s42 = sadd.s32 %s41, %s34
      %s43 = ssub.s32 %s40, %s42
      %p44 = scmp.eq.s32.totalorder %s43, 0
      %s46 = sadd.s32 %s45, 1
      %s47 = scalar_select %p44, %s45, %s46
      %p50 = pneg %p44
      %p51 = scmp.eq.s32.totalorder %s19, 3
      %p52 = por %p50, %p51
      %p53 = scmp.ne.s32.totalorder %s45, %s48
      %p54 = scmp.eq.s32.totalorder %s19, 0
      %p55 = por %p53, %p54
      %p56 = scmp.ne.s32.totalorder %s45, %s48
      %p57 = scmp.eq.s32.totalorder %s24, 3
      %p58 = por %p56, %p57
      %p59 = scmp.ne.s32.totalorder %s48, %s49
      %p60 = scmp.eq.s32.totalorder %s24, 0
      %p61 = por %p59, %p60
      %p62 = scmp.ne.s32.totalorder %s48, %s49
      %p63 = scmp.eq.s32.totalorder %s25, 3
      %p64 = por %p62, %p63
      %p66 = scmp.ne.s32.totalorder %s49, %s65
      %p67 = scmp.eq.s32.totalorder %s25, 0
      %p68 = por %p66, %p67
      %s69 = ssub.s32 %s26, %s38
      %p70 = scmp.eq.s32.totalorder %s69, 0
      %s72 = sadd.s32 %s71, 1
      %s73 = scalar_select %p70, %s71, %s72
      %p76 = pneg %p70
      %p77 = scmp.eq.s32.totalorder %s19, 3
      %p78 = por %p76, %p77
      %p79 = scmp.ne.s32.totalorder %s71, %s74
      %p80 = scmp.eq.s32.totalorder %s19, 0
      %p81 = por %p79, %p80
      %p82 = scmp.ne.s32.totalorder %s71, %s74
      %p83 = scmp.eq.s32.totalorder %s24, 3
      %p84 = por %p82, %p83
      %p85 = scmp.ne.s32.totalorder %s74, %s75
      %p86 = scmp.eq.s32.totalorder %s24, 0
      %p87 = por %p85, %p86
      %p88 = scmp.ne.s32.totalorder %s74, %s75
      %p89 = scmp.eq.s32.totalorder %s25, 3
      %p90 = por %p88, %p89
      %p92 = scmp.ne.s32.totalorder %s75, %s91
      %p93 = scmp.eq.s32.totalorder %s25, 0
      %p94 = por %p92, %p93
      %p95 = scmp.le.s32.totalorder 1, %s19
      %p96 = scmp.lt.s32.totalorder %s19, 5
      %p97 = pnand %p95, %p96
      %p98 = pneg %p97
      // Predicated region
      $region9: #{tpu_custom_call.1} parent=5 // pred_check
        _
      $region10: #{tpu_custom_call.1} parent=5 // pred_check_branch
        %100 = sbr.rel (%p97) target = $region12
      $region11: #{tpu_custom_call.1} parent=5 // pred_region
        %s101 = ssub.s32 %s19, 1
      $region12: #{tpu_custom_call.1} parent=5 // pred_fallthru
        _
      %p102 = scmp.lt.s32.totalorder %s19, 4
      // Predicated region
      $region13: #{tpu_custom_call.1} parent=5 // pred_check
        %p103 = pneg %p102
      $region14: #{tpu_custom_call.1} parent=5 // pred_check_branch
        %105 = sbr.rel (%p103) target = $region16
      $region15: #{tpu_custom_call.1} parent=5 // pred_region
        // Predicated region
        $region17: #{tpu_custom_call.1} parent=15 // pred_check
          %p106 = pneg %p55
        $region18: #{tpu_custom_call.1} parent=15 // pred_check_branch
          %108 = sbr.rel (%p106) target = $region20
        $region19: #{tpu_custom_call.1} parent=15 // pred_region
          %s109 = sand.u32 %s45, 1
          %s110 = scalar_lea.sflag [#allocation8], %s109
          %s111 = sand.u32 %s45, 1
          %s112 = smul.addr %s111, 32
          %s113 = scalar_lea.vmem [#allocation7], %s112
          %s114 = smul.u32 %s26, 2
          %s115 = sadd.s32 %s114, %s27
          %s116 = smul.u32 2, %s115
          %s118 = ssub.s32 512, 512
          %119 = vsyncadd %s110, %s118
          %s120 = smul.addr %s116, 2
          %s121 = smul.addr %s120, 128
          %s122 = scalar_lea.hbm %s1, %s121
          %s123 = sshll.u32 %s113, 4
          %s124 = int_to_ptr.vmem [resolvable:$true] %s123
          %129 = dma.hbm_to_vmem [thread:$0]  %s122, 512, %s124, %s110, 256, 256, 16
        $region20: #{tpu_custom_call.1} parent=15 // pred_fallthru
          _
      $region16: #{tpu_custom_call.1} parent=5 // pred_fallthru
        _
      %p130 = scmp.le.s32.totalorder 1, %s19
      %p131 = scmp.lt.s32.totalorder %s19, 5
      %p132 = pnand %p130, %p131
      %p133 = pneg %p132
      // Predicated region
      $region21: #{tpu_custom_call.1} parent=5 // pred_check
        _
      $region22: #{tpu_custom_call.1} parent=5 // pred_check_branch
        %135 = sbr.rel (%p132) target = $region24
      $region23: #{tpu_custom_call.1} parent=5 // pred_region
        %s136 = ssub.s32 %s19, 1
        %s137 = sand.u32 %s48, 1
        %s138 = scalar_lea.sflag [#allocation8], %s137
        %s139 = sand.u32 %s48, 1
        %s140 = smul.addr %s139, 32
        %s141 = scalar_lea.vmem [#allocation7], %s140
        // Predicated region
        $region25: #{tpu_custom_call.1} parent=23 // pred_check
          %p142 = pneg %p61
        $region26: #{tpu_custom_call.1} parent=23 // pred_check_branch
          %144 = sbr.rel (%p142) target = $region28
        $region27: #{tpu_custom_call.1} parent=23 // pred_region
          %145 = dma.done %s138, 512
        $region28: #{tpu_custom_call.1} parent=23 // pred_fallthru
          _
        %s146 = sand.u32 %s48, 1
        %s147 = scalar_lea.sflag [#allocation8], %s146
        %s148 = sand.u32 %s48, 1
        %s149 = smul.addr %s148, 32
        %s150 = scalar_lea.vmem [#allocation7], %s149
        %p151 = pneg %p61
        %p152 = pneg %p58
        %p153 = pneg %p87
        %p154 = pneg %p84
        %s155 = sand.u32 %s74, 1
        %s156 = scalar_lea.sflag [#allocation9], %s155
        %s157 = sand.u32 %s74, 1
        %s158 = smul.addr %s157, 8
        %s159 = scalar_lea.vmem [#allocation10], %s158
        %s160 = smul.u32 %s28, 2
        %s161 = sadd.s32 %s160, %s29
        %s162 = smul.u32 2, %s161
        %p163 = scmp.lt.s32.totalorder %s29, 0
        %s164 = ssub.s32 0, %s29
        %s165 = scalar_select %p163, %s164, %s29
        %s166 = sand.u32 %s165, 1
        %s167 = ssub.s32 0, %s166
        %s168 = scalar_select %p163, %s167, %s166
        %p169 = scmp.ne.s32.totalorder %s168, 0
        %p170 = scmp.lt.s32.totalorder %s168, 0
        %p171 = pnand %p170, %p169
        %p172 = pneg %p171
        %s173 = sadd.s32 %s168, 2
        %s174 = scalar_select %p172, %s173, %s168
        %p175 = scmp.eq.s32.totalorder %s29, 0
        // Predicated region
        $region29: #{tpu_custom_call.1} parent=23 // pred_check
          %p176 = pneg %p175
        $region30: #{tpu_custom_call.1} parent=23 // pred_check_branch
          %178 = sbr.rel (%p176) target = $region32
        $region31: #{tpu_custom_call.1} parent=23 // pred_region
          %vm179 = vcmask 7168
          %180 = vst.msk [vmem:[#allocation4] sm:$0xff] %vm179, 0.0
          %181 = vst.msk [vmem:[#allocation4 + $0x8] sm:$0xff] %vm179, 0.0
          %s182 = smul.u32 %s28, 32
          loop: start=0, step=1, limit=16
          $region33: #{tpu_custom_call.1} parent=31 // loop_pre_header
            _
          $region34: #{tpu_custom_call.1} parent=31 // loop_header
            %s184 = sphi 0, %s188
            %p185 = scmp.ge.s32.totalorder %s184, 16
          $region35: #{tpu_custom_call.1} parent=31 // loop_header_branch
            %187 = sbr.rel (%p185) target = $region39
          $region36: #{tpu_custom_call.1} parent=31 // loop_body
            %s189 = sadd.s32 %s182, %s184
            %p190 = scmp.lt.s32.totalorder %s189, 63
            %s191 = scalar_select %p190, %s189, 63
            %s192 = sld [smem:[#allocation6 + %s191]]
            %s193 = sshrl.u32 %s192, 3
            %s194 = sand.u32 %s192, 7
            %s195 = smul.u32 %s193, 16
            %s196 = sadd.s32 %s194, %s195
            %s197 = smul.addr %s196, 16
            %s198 = scalar_lea.hbm %s2, %s197
            %s199 = sshrl.u32 %s184, 3
            %s200 = sand.u32 %s184, 7
            %s201 = smul.u32 %s199, 16
            %s202 = sadd.s32 %s200, %s201
            %s203 = scalar_lea.vmem [#allocation2], %s202
            %s205 = sshll.u32 %s203, 4
            %s206 = int_to_ptr.vmem [resolvable:$true] %s205
            %208 = dma.hbm_to_vmem [thread:$0]  %s198, 32, %s206, [#allocation3], 128, 128, 1
          $region37: #{tpu_custom_call.1} parent=31 // loop_footer
            %s188 = sadd.s32 1, %s184
          $region38: #{tpu_custom_call.1} parent=31 // loop_footer_branch
            %183 = sbr.rel target = $region34
          $region39: #{tpu_custom_call.1} parent=31 // loop_exit
            _
        $region32: #{tpu_custom_call.1} parent=23 // pred_fallthru
          _
        %s209 = sadd.s32 %s29, 1
        %p210 = scmp.lt.s32.totalorder %s209, 2
        // Predicated region
        $region40: #{tpu_custom_call.1} parent=23 // pred_check
          %p211 = pneg %p210
        $region41: #{tpu_custom_call.1} parent=23 // pred_check_branch
          %213 = sbr.rel (%p211) target = $region43
        $region42: #{tpu_custom_call.1} parent=23 // pred_region
          %s214 = smul.u32 %s28, 2
          %s215 = sadd.s32 %s214, %s29
          %s216 = sadd.s32 %s215, 1
          %s217 = ssub.s32 1, %s174
          %s218 = smul.u32 %s216, 16
          loop: start=0, step=1, limit=16
          $region44: #{tpu_custom_call.1} parent=42 // loop_pre_header
            _
          $region45: #{tpu_custom_call.1} parent=42 // loop_header
            %s220 = sphi 0, %s224
            %p221 = scmp.ge.s32.totalorder %s220, 16
          $region46: #{tpu_custom_call.1} parent=42 // loop_header_branch
            %223 = sbr.rel (%p221) target = $region50
          $region47: #{tpu_custom_call.1} parent=42 // loop_body
            %s225 = sadd.s32 %s218, %s220
            %p226 = scmp.lt.s32.totalorder %s225, 63
            %s227 = scalar_select %p226, %s225, 63
            %s228 = sld [smem:[#allocation6 + %s227]]
            %s229 = sshrl.u32 %s228, 3
            %s230 = sand.u32 %s228, 7
            %s231 = smul.u32 %s229, 16
            %s232 = sadd.s32 %s230, %s231
            %s233 = smul.addr %s232, 16
            %s234 = scalar_lea.hbm %s2, %s233
            %s235 = sshrl.u32 %s220, 3
            %s236 = sand.u32 %s220, 7
            %s237 = smul.u32 %s235, 16
            %s238 = sadd.s32 %s236, %s237
            %s239 = smul.u32 %s217, 32
            %s240 = sadd.s32 %s238, %s239
            %s241 = scalar_lea.vmem [#allocation2], %s240
            %s242 = scalar_lea.sflag [#allocation3], %s217
            %s244 = sshll.u32 %s241, 4
            %s245 = int_to_ptr.vmem [resolvable:$true] %s244
            %247 = dma.hbm_to_vmem [thread:$0]  %s234, 32, %s245, %s242, 128, 128, 1
          $region48: #{tpu_custom_call.1} parent=42 // loop_footer
            %s224 = sadd.s32 1, %s220
          $region49: #{tpu_custom_call.1} parent=42 // loop_footer_branch
            %219 = sbr.rel target = $region45
          $region50: #{tpu_custom_call.1} parent=42 // loop_exit
            _
        $region43: #{tpu_custom_call.1} parent=23 // pred_fallthru
          _
        %s248 = smul.u32 %s174, 4
        %s249 = smul.addr %s248, 8
        %s250 = scalar_lea.vmem [#allocation2], %s249
        %s251 = scalar_lea.sflag [#allocation3], %s174
        %s252 = smul.u32 8, 2
        %s253 = smul.u32 %s252, 2
        %s254 = sshll.u32 %s253, 4
        %255 = dma.done %s251, %s254
        %v256 = vld [vmem:[%s141] sm:$0xff]
        %v257 = vld [vmem:[%s141 + $0x8] sm:$0xff]
        %v258 = vld [vmem:[%s141 + $0x10] sm:$0xff]
        %v259 = vld [vmem:[%s141 + $0x18] sm:$0xff]
        %v260 = vld [vmem:[%s250] sm:$0xff]
        %v261 = vld [vmem:[%s250 + $0x8] sm:$0xff]
        %v262 = vld [vmem:[%s250 + $0x10] sm:$0xff]
        %v263 = vld [vmem:[%s250 + $0x18] sm:$0xff]
        %v264 = vsub.f32 %v256, %v260
        %v265 = vsub.f32 %v257, %v261
        %v266 = vsub.f32 %v258, %v262
        %v267 = vsub.f32 %v259, %v263
        %v268 = vmul.f32 %v264, %v264
        %v269 = vmul.f32 %v265, %v265
        %v270 = vmul.f32 %v266, %v266
        %v271 = vmul.f32 %v267, %v267
        %v272 = vadd.f32 %v268, %v269
        %273 = vadd.xlane.f32.xlu0 %v272
        %v274 = vpop.xlane.xlu0 %273
        %v275 = vadd.f32 %v270, %v271
        %276 = vadd.xlane.f32.xlu0 %v275
        %v277 = vpop.xlane.xlu0 %276
        %v278 = vmax.f32 %v274, 1e-12
        %v279 = vmax.f32 %v277, 1e-12
        %v280 = vmin.f32 %v278, 1e+12
        %v281 = vmin.f32 %v279, 1e+12
        %s282 = smul.u32 %s28, 2
        %s283 = sadd.s32 %s282, %s29
        %s284 = smul.u32 %s283, 16
        %v285 = vlaneseq
        %v286 = vshrl.u32 %v285, 7
        %v287 = vadd.s32 %v286, 8
        %v288 = vstv %s284
        %v289 = vadd.s32 %v288, %v286
        %v290 = vadd.s32 %v288, %v287
        %v291 = vld [vmem:[#allocation4] sm:$0xff]
        %v292 = vld [vmem:[#allocation4 + $0x8] sm:$0xff]
        %vm293 = vcmp.lt.s32.totalorder %v289, 64
        %vm294 = vcmp.lt.s32.totalorder %v290, 64
        %v295 = vsel %vm293, %v280, 0.0
        %v296 = vsel %vm294, %v281, 0.0
        %v297 = vadd.f32 %v291, %v295
        %v298 = vadd.f32 %v292, %v296
        %vm299 = vcmask 7168
        %300 = vst.msk [vmem:[#allocation4] sm:$0xff] %vm299, %v297
        %301 = vst.msk [vmem:[#allocation4 + $0x8] sm:$0xff] %vm299, %v298
        %p302 = scmp.eq.s32.totalorder %s29, 1
        // Predicated region
        $region51: #{tpu_custom_call.1} parent=23 // pred_check
          %p303 = pneg %p302
        $region52: #{tpu_custom_call.1} parent=23 // pred_check_branch
          %305 = sbr.rel (%p303) target = $region54
        $region53: #{tpu_custom_call.1} parent=23 // pred_region
          %v306 = vld [vmem:[#allocation4] sm:$0xff]
          %v307 = vld [vmem:[#allocation4 + $0x8] sm:$0xff]
          %v308 = vsel %vm299, %v306, 0.0
          %v309 = vsel %vm299, %v307, 0.0
          %v310 = vadd.f32 %v308, %v309
          %311 = vadd.xlane.f32.xlu0 %v310
          %v312 = vpop.xlane.xlu0 %311
          %v313 = vrot.slane %v312, 4
          %v314 = vadd.f32 %v312, %v313
          %v315 = vrot.slane %v314, 2
          %v316 = vadd.f32 %v314, %v315
          %v317 = vrot.slane %v316, 1
          %v318 = vadd.f32 %v316, %v317
          %s319 = vtos %v318
          %v320 = vstv %s319
          %321 = vst [vmem:[%s159] sm:$0xff] %v320
        $region54: #{tpu_custom_call.1} parent=23 // pred_fallthru
          _
        %s322 = sand.u32 %s74, 1
        %s323 = scalar_lea.sflag [#allocation9], %s322
        %s324 = sand.u32 %s74, 1
        %s325 = smul.addr %s324, 8
        %s326 = scalar_lea.vmem [#allocation10], %s325
        // Predicated region
        $region55: #{tpu_custom_call.1} parent=23 // pred_check
          %p327 = pneg %p84
        $region56: #{tpu_custom_call.1} parent=23 // pred_check_branch
          %329 = sbr.rel (%p327) target = $region58
        $region57: #{tpu_custom_call.1} parent=23 // pred_region
          %s331 = ssub.s32 128, 128
          %332 = vsyncadd %s323, %s331
          %s333 = smul.addr %s28, 128
          %s334 = scalar_lea.hbm %s3, %s333
          %s336 = sshll.u32 %s326, 4
          %s337 = int_to_ptr.vmem [resolvable:$true] %s336
          %339 = dma.vmem_to_hbm [thread:$0]  %s337, 128, %s334, %s323
        $region58: #{tpu_custom_call.1} parent=23 // pred_fallthru
          _
      $region24: #{tpu_custom_call.1} parent=5 // pred_fallthru
        _
      %p340 = scmp.le.s32.totalorder 2, %s19
      // Predicated region
      $region59: #{tpu_custom_call.1} parent=5 // pred_check
        %p341 = pneg %p340
      $region60: #{tpu_custom_call.1} parent=5 // pred_check_branch
        %343 = sbr.rel (%p341) target = $region62
      $region61: #{tpu_custom_call.1} parent=5 // pred_region
        %s344 = ssub.s32 %s19, 2
        // Predicated region
        $region63: #{tpu_custom_call.1} parent=61 // pred_check
          %p345 = pneg %p90
        $region64: #{tpu_custom_call.1} parent=61 // pred_check_branch
          %347 = sbr.rel (%p345) target = $region66
        $region65: #{tpu_custom_call.1} parent=61 // pred_region
          %s348 = sand.u32 %s75, 1
          %s349 = scalar_lea.sflag [#allocation9], %s348
          %s350 = sand.u32 %s75, 1
          %s351 = smul.addr %s350, 8
          %s352 = scalar_lea.vmem [#allocation10], %s351
          %353 = dma.done %s349, 128
        $region66: #{tpu_custom_call.1} parent=61 // pred_fallthru
          _
      $region62: #{tpu_custom_call.1} parent=5 // pred_fallthru
        _
    $region6: #{tpu_custom_call.1} parent=1 // loop_footer
      %s23 = sadd.s32 1, %s19
    $region7: #{tpu_custom_call.1} parent=1 // loop_footer_branch
      %18 = sbr.rel target = $region3
    $region8: #{tpu_custom_call.1} parent=1 // loop_exit
      _
    %354 = vsyncpa [#allocation8], 1
    %s355 = scalar_lea.sflag [#allocation8], 1
    %356 = vsyncpa %s355, 1
    %357 = vsyncpa [#allocation9], 1
    %s358 = scalar_lea.sflag [#allocation9], 1
    %359 = vsyncpa %s358, 1
  %360 = vsyncmov [#allocation3]
  %s361 = vpop.sfrf %360
  %p362 = scmp.eq.s32.totalorder %s361, 0
  %p363 = pneg %p362
  %365 = shalt.err (%p363)
  %s366 = scalar_lea.sflag [#allocation3], 1
  %367 = vsyncmov %s366
  %s368 = vpop.sfrf %367
  %p369 = scmp.eq.s32.totalorder %s368, 0
  %p370 = pneg %p369
  %372 = shalt.err (%p370)

</llo_original>
